<compile_context>
chip_gen: v6e
topology: v6e:2x2x1
jax: 0.10.0
libtpu: 0.0.40
codegen_flags: <defaults>
</compile_context>

<pallas_src>
import functools
import math

import numpy as np

import jax
import jax.numpy as jnp
from jax.experimental import pallas as pl
from jax.experimental.pallas import tpu as pltpu


# The torch module calls F.leaky_relu(x) with the default slope (0.01).
# (Canonical HiFi-GAN uses 0.1; this follows the module as specified.)
LRELU_SLOPE = 0.01


# ---------------------------------------------------------------------------
# Pallas kernel: K-tap channels-last conv tile with fused bias + leaky-ReLU.
# ---------------------------------------------------------------------------
def _tapconv_kernel(x_ref, w_ref, b_ref, o_ref, *, taps, thout, ho_axis,
                    apply_act, slope, mode):
    """One (THout, TN) output tile of a K-tap channels-last conv.

    x_ref : (Hq, Cx)    padded, phase-folded activation slab of one
                        batch*period item (whole slab resident in VMEM).
    w_ref : (Ctot, TN)  packed weights   (mode 'mxu' / 'vpu_outer'), or
            (1, Ctot)   transposed weights (mode 'vpu_reduce', Cout == 1).
    b_ref : (1, TN)     f32 bias.
    o_ref : (THout, TN) output tile.

    out = sum_t  x[base+off_t : base+off_t+THout, :ct_t] @ W[w0_t : w0_t+ct_t]
    with f32 accumulation; bias + leaky-ReLU fused into the epilogue.
    """
    base = pl.program_id(ho_axis) * thout
    if thout % 8 == 0:
        base = pl.multiple_of(base, 8)

    acc = None
    for off, ct, w0 in taps:
        xs = x_ref[pl.ds(base + off, thout), pl.ds(0, ct)]
        if mode == "mxu":
            part = jnp.dot(xs, w_ref[pl.ds(w0, ct), :],
                           preferred_element_type=jnp.float32)
        elif mode == "vpu_outer":
            # Tiny contraction (Cin == 1): a few broadcast FMAs on the VPU.
            part = None
            for c in range(ct):
                p = (xs[:, c:c + 1].astype(jnp.float32)
                     * w_ref[pl.ds(w0 + c, 1), :].astype(jnp.float32))
                part = p if part is None else part + p
        else:  # "vpu_reduce": Cout == 1 -> elementwise multiply + lane reduce.
            wrow = w_ref[:, pl.ds(w0, ct)].astype(jnp.float32)
            part = jnp.sum(xs.astype(jnp.float32) * wrow,
                           axis=-1, keepdims=True)
        acc = part if acc is None else acc + part

    y = acc + b_ref[...]
    if apply_act:
        y = jnp.where(y > 0, y, slope * y)      # F.leaky_relu
    o_ref[...] = y.astype(o_ref.dtype)


def tap_conv(x, w, b, *, stride, pad, apply_act, out_dtype,
             slope=LRELU_SLOPE, tm_max=512, tn_max=512):
    """Conv2d with a (K,1) kernel / (stride,1) stride / (pad,0) padding on a
    channels-last (N, H, Cin) activation, lowered to one fused Pallas kernel.

    The stride is removed by reshaping the zero-padded input into
    (N, Hq, stride*Cin) phase rows, so each tap is a contiguous static slice
    (no strided loads, no HBM im2col).  x: (N,H,Cin), w: (K,Cin,Cout),
    b: (Cout,) -> (N, Hout, Cout) in `out_dtype`.
    """
    N, H, Cin = x.shape
    K, _, Cout = w.shape
    s = stride
    Hp = H + 2 * pad
    Hout = (Hp - K) // s + 1

    thout = Hout if Hout <= tm_max else tm_max          # full dim or mult of 8
    n_ho = pl.cdiv(Hout, thout)
    n_m = (K - 1) // s + 1                              # distinct row offsets
    # Enough rows that every in-kernel read (incl. masked partial last tile)
    # stays in bounds; extra rows are zeros and never affect valid outputs.
    Hq = max(n_ho * thout + n_m - 1, pl.cdiv(Hp, s))
    right_pad = s * Hq - pad - H
    xq = jnp.pad(x, ((0, 0), (pad, right_pad), (0, 0))).reshape(N, Hq, s * Cin)
    Cx = s * Cin

    taps, off = [], 0
    for m in range(n_m):
        ct = min(s, K - m * s) * Cin
        taps.append((m, ct, off))
        off += ct
    Ctot = K * Cin
    w2 = w.reshape(Ctot, Cout)                          # row index = k*Cin + c
    b2 = b.reshape(1, Cout).astype(jnp.float32)

    if Cout >= 128:
        mode = "mxu"                                    # bf16 MXU, f32 accumulate
        xq = xq.astype(jnp.bfloat16)
        w2 = w2.astype(jnp.bfloat16)
        tn = Cout if Cout <= tn_max else tn_max
    elif Cout == 1:
        mode = "vpu_reduce"                             # post conv: lane reduction
        w2 = w2.T.astype(jnp.float32)                   # (1, Ctot)
        tn = 1
    else:
        mode = "vpu_outer"                              # first conv (Cin=1)
        w2 = w2.astype(jnp.float32)
        tn = Cout
    n_co = pl.cdiv(Cout, tn)

    # Grid ordering: keep whichever operand dominates HBM traffic fetched once.
    x_bytes = xq.size * xq.dtype.itemsize
    w_bytes = w2.size * w2.dtype.itemsize
    if x_bytes + N * w_bytes <= w_bytes + n_co * x_bytes:
        grid = (N, n_co, n_ho)                          # x slab fetched once per n
        x_map = lambda n, co, ho: (n, 0, 0)
        w_map = lambda n, co, ho: (0, co)
        o_map = lambda n, co, ho: (n, ho, co)
    else:
        grid = (n_co, N, n_ho)                          # each weight tile fetched once
        x_map = lambda co, n, ho: (n, 0, 0)
        w_map = lambda co, n, ho: (0, co)
        o_map = lambda co, n, ho: (n, ho, co)

    if mode == "vpu_reduce":
        w_spec = pl.BlockSpec((1, Ctot), lambda *_: (0, 0))
    else:
        w_spec = pl.BlockSpec((Ctot, tn), w_map)

    kernel = functools.partial(_tapconv_kernel, taps=tuple(taps), thout=thout,
                               ho_axis=2, apply_act=apply_act, slope=slope,
                               mode=mode)

    # TODO(synk): for extremely long inputs (multi-second audio at the early
    # layers) the per-item slab no longer fits VMEM; add an H-tiled halo path.
    return pl.pallas_call(
        kernel,
        out_shape=jax.ShapeDtypeStruct((N, Hout, Cout), out_dtype),
        grid_spec=pltpu.PrefetchScalarGridSpec(
            num_scalar_prefetch=0,
            grid=grid,
            in_specs=[
                pl.BlockSpec((None, Hq, Cx), x_map),    # full slab per item
                w_spec,
                pl.BlockSpec((1, tn), w_map),           # bias
            ],
            out_specs=pl.BlockSpec((None, thout, tn), o_map),
        ),
        compiler_params=pltpu.CompilerParams(
            dimension_semantics=("parallel", "parallel", "arbitrary"),
            vmem_limit_bytes=32 * 1024 * 1024),
    )(xq, w2, b2)


# ---------------------------------------------------------------------------
# Module forward.
# ---------------------------------------------------------------------------
def _to_nchw(h, B, W):
    """(N=B*W, H, C) -> (B, C, H, W), matching the PyTorch activation layout."""
    N, H, C = h.shape
    return h.reshape(B, W, H, C).transpose(0, 3, 2, 1)


def init_params(key, kernel_size=5):
    """Deterministic synthetic parameters. weight_norm is an identity
    reparameterization at init time, so plain weights reproduce the forward."""
    chans = [(1, 32), (32, 128), (128, 512), (512, 1024), (1024, 1024)]
    params = []
    for cin, cout in chans:
        key, k1, k2 = jax.random.split(key, 3)
        w = jax.random.normal(k1, (kernel_size, cin, cout), jnp.float32)
        w = w / math.sqrt(kernel_size * cin)
        bias = 0.1 * jax.random.normal(k2, (cout,), jnp.float32)
        params.append((w, bias))
    key, k1, k2 = jax.random.split(key, 3)
    wp = jax.random.normal(k1, (3, 1024, 1), jnp.float32) / math.sqrt(3 * 1024)
    bp = 0.1 * jax.random.normal(k2, (1,), jnp.float32)
    return params, (wp, bp)


def discriminator_p_forward(x, params, post_params, *, period, stride=3):
    """x: (B, 1, T) float32. Returns (flattened logits, fmap) like the torch module."""
    B, C, T = x.shape
    if T % period != 0:
        n_pad = period - T % period
        x = jnp.pad(x, ((0, 0), (0, 0), (0, n_pad)), mode="reflect")
        T = T + n_pad
    H, W = T // period, period
    x4 = x.reshape(B, C, H, W)                            # same as torch .view
    h = x4.transpose(0, 3, 2, 1).reshape(B * W, H, C)     # (N=B*period, H, C)

    feats = []
    strides = [stride, stride, stride, stride, 1]
    for (w, b), s in zip(params, strides):
        h = tap_conv(h, w, b, stride=s, pad=2, apply_act=True,
                     out_dtype=jnp.bfloat16)              # bf16 inter-layer chain
        feats.append(h)
    wp, bp = post_params
    h = tap_conv(h, wp, bp, stride=1, pad=1, apply_act=False,
                 out_dtype=jnp.float32)
    feats.append(h)

    # NCHW / f32 conversion done once at the end (API parity), off the chain.
    fmap = [_to_nchw(f, B, W).astype(jnp.float32) for f in feats]
    out = fmap[-1].reshape(B, -1)                         # torch.flatten(x, 1, -1)
    return out, fmap


# ---------------------------------------------------------------------------
# Pure-JAX NCHW reference (correctness check only).
# ---------------------------------------------------------------------------
def _ref_forward(x, params, post_params, period):
    B, C, T = x.shape
    if T % period != 0:
        n_pad = period - T % period
        x = jnp.pad(x, ((0, 0), (0, 0), (0, n_pad)), mode="reflect")
        T = T + n_pad
    h = x.reshape(B, C, T // period, period)
    strides = [3, 3, 3, 3, 1]
    fmap = []
    for (w, b), s in zip(params, strides):
        wt = w.transpose(2, 1, 0)[..., None]              # (Cout, Cin, K, 1) OIHW
        h = jax.lax.conv_general_dilated(
            h, wt, window_strides=(s, 1), padding=((2, 2), (0, 0)),
            dimension_numbers=("NCHW", "OIHW", "NCHW"),
            precision=jax.lax.Precision.HIGHEST)
        h = h + b[None, :, None, None]
        h = jnp.where(h > 0, h, LRELU_SLOPE * h)
        fmap.append(h)
    wp, bp = post_params
    wt = wp.transpose(2, 1, 0)[..., None]
    h = jax.lax.conv_general_dilated(
        h, wt, window_strides=(1, 1), padding=((1, 1), (0, 0)),
        dimension_numbers=("NCHW", "OIHW", "NCHW"),
        precision=jax.lax.Precision.HIGHEST)
    h = h + bp[None, :, None, None]
    fmap.append(h)
    return h.reshape(B, -1), fmap


if __name__ == "__main__":
    key = jax.random.PRNGKey(0)
    kx, kp = jax.random.split(key)

    period = 3
    B, C, T = 2, 1, 16           # T % period != 0 -> exercises the reflect-pad path
    x = jax.random.normal(kx, (B, C, T), jnp.float32)
    params, post_params = init_params(kp)

    out, fmap = discriminator_p_forward(x, params, post_params, period=period)
    out = jax.block_until_ready(out)
    fmap = [jax.block_until_ready(f) for f in fmap]

    ref_out, ref_fmap = _ref_forward(x, params, post_params, period)
    assert out.shape == ref_out.shape, (out.shape, ref_out.shape)
    # bf16 inter-layer activations + bf16 MXU inputs (f32 accumulate) -> loosen
    # the tolerance vs. the f32 HIGHEST-precision reference.
    np.testing.assert_allclose(np.asarray(out, np.float32),
                               np.asarray(ref_out, np.float32),
                               rtol=8e-2, atol=8e-2)
    for a, r in zip(fmap, ref_fmap):
        assert a.shape == r.shape, (a.shape, r.shape)
        np.testing.assert_allclose(np.asarray(a, np.float32),
                                   np.asarray(r, np.float32),
                                   rtol=8e-2, atol=8e-2)

    print("KERNEL_OK")
</pallas_src>

<mosaic_0001>
module attributes {stable_mosaic.version = 11 : i64} {
  func.func @_tapconv_kernel(%arg0: i32, %arg1: i32, %arg2: i32, %arg3: memref<1x4x3xf32, #tpu.memory_space<vmem>>, %arg4: memref<5x32xf32, #tpu.memory_space<vmem>>, %arg5: memref<1x32xf32, #tpu.memory_space<vmem>>, %arg6: memref<1x2x32xbf16, #tpu.memory_space<vmem>>) attributes {dimension_semantics = [#tpu.dimension_semantics<parallel>, #tpu.dimension_semantics<parallel>, #tpu.dimension_semantics<arbitrary>], iteration_bounds = array<i64: 1, 6, 1>, scalar_prefetch = 0 : i64, scratch_operands = 0 : i64, tpu.core_type = #tpu.core_type<tc>, window_params = [{transform_indices = @transform_0, window_bounds = array<i64: 1, 4, 3>}, {transform_indices = @transform_1, window_bounds = array<i64: 5, 32>}, {transform_indices = @transform_2, window_bounds = array<i64: 1, 32>}, {transform_indices = @transform_3, window_bounds = array<i64: 1, 2, 32>}]} {
    %c2_i32 = arith.constant 2 : i32
    %0 = arith.muli %arg2, %c2_i32 : i32
    %c0_i32 = arith.constant 0 : i32
    %1 = arith.addi %0, %c0_i32 : i32
    %c0 = arith.constant 0 : index
    %2 = arith.index_cast %1 : i32 to index
    %c0_0 = arith.constant 0 : index
    %3 = vector.load %arg3[%c0, %2, %c0_0] : memref<1x4x3xf32, #tpu.memory_space<vmem>>, vector<1x2x3xf32>
    %4 = vector.shape_cast %3 : vector<1x2x3xf32> to vector<2x3xf32>
    %5 = vector.extract_strided_slice %4 {offsets = [0, 0], sizes = [2, 1], strides = [1, 1]} : vector<2x3xf32> to vector<2x1xf32>
    %c0_1 = arith.constant 0 : index
    %c0_2 = arith.constant 0 : index
    %6 = vector.load %arg4[%c0_1, %c0_2] : memref<5x32xf32, #tpu.memory_space<vmem>>, vector<1x32xf32>
    %7 = vector.broadcast %5 : vector<2x1xf32> to vector<2x32xf32>
    %8 = vector.broadcast %6 : vector<1x32xf32> to vector<2x32xf32>
    %9 = arith.mulf %7, %8 : vector<2x32xf32>
    %10 = vector.extract_strided_slice %4 {offsets = [0, 1], sizes = [2, 1], strides = [1, 1]} : vector<2x3xf32> to vector<2x1xf32>
    %c1 = arith.constant 1 : index
    %c0_3 = arith.constant 0 : index
    %11 = vector.load %arg4[%c1, %c0_3] : memref<5x32xf32, #tpu.memory_space<vmem>>, vector<1x32xf32>
    %12 = vector.broadcast %10 : vector<2x1xf32> to vector<2x32xf32>
    %13 = vector.broadcast %11 : vector<1x32xf32> to vector<2x32xf32>
    %14 = arith.mulf %12, %13 : vector<2x32xf32>
    %15 = arith.addf %9, %14 : vector<2x32xf32>
    %16 = vector.extract_strided_slice %4 {offsets = [0, 2], sizes = [2, 1], strides = [1, 1]} : vector<2x3xf32> to vector<2x1xf32>
    %c2 = arith.constant 2 : index
    %c0_4 = arith.constant 0 : index
    %17 = vector.load %arg4[%c2, %c0_4] : memref<5x32xf32, #tpu.memory_space<vmem>>, vector<1x32xf32>
    %18 = vector.broadcast %16 : vector<2x1xf32> to vector<2x32xf32>
    %19 = vector.broadcast %17 : vector<1x32xf32> to vector<2x32xf32>
    %20 = arith.mulf %18, %19 : vector<2x32xf32>
    %21 = arith.addf %15, %20 : vector<2x32xf32>
    %c1_i32 = arith.constant 1 : i32
    %22 = arith.addi %0, %c1_i32 : i32
    %c0_5 = arith.constant 0 : index
    %23 = arith.index_cast %22 : i32 to index
    %c0_6 = arith.constant 0 : index
    %24 = vector.load %arg3[%c0_5, %23, %c0_6] : memref<1x4x3xf32, #tpu.memory_space<vmem>>, vector<1x2x2xf32>
    %25 = vector.shape_cast %24 : vector<1x2x2xf32> to vector<2x2xf32>
    %26 = vector.extract_strided_slice %25 {offsets = [0, 0], sizes = [2, 1], strides = [1, 1]} : vector<2x2xf32> to vector<2x1xf32>
    %c3 = arith.constant 3 : index
    %c0_7 = arith.constant 0 : index
    %27 = vector.load %arg4[%c3, %c0_7] : memref<5x32xf32, #tpu.memory_space<vmem>>, vector<1x32xf32>
    %28 = vector.broadcast %26 : vector<2x1xf32> to vector<2x32xf32>
    %29 = vector.broadcast %27 : vector<1x32xf32> to vector<2x32xf32>
    %30 = arith.mulf %28, %29 : vector<2x32xf32>
    %31 = vector.extract_strided_slice %25 {offsets = [0, 1], sizes = [2, 1], strides = [1, 1]} : vector<2x2xf32> to vector<2x1xf32>
    %c4 = arith.constant 4 : index
    %c0_8 = arith.constant 0 : index
    %32 = vector.load %arg4[%c4, %c0_8] : memref<5x32xf32, #tpu.memory_space<vmem>>, vector<1x32xf32>
    %33 = vector.broadcast %31 : vector<2x1xf32> to vector<2x32xf32>
    %34 = vector.broadcast %32 : vector<1x32xf32> to vector<2x32xf32>
    %35 = arith.mulf %33, %34 : vector<2x32xf32>
    %36 = arith.addf %30, %35 : vector<2x32xf32>
    %37 = arith.addf %21, %36 : vector<2x32xf32>
    %c0_9 = arith.constant 0 : index
    %c0_10 = arith.constant 0 : index
    %38 = vector.load %arg5[%c0_9, %c0_10] : memref<1x32xf32, #tpu.memory_space<vmem>>, vector<1x32xf32>
    %39 = vector.broadcast %38 : vector<1x32xf32> to vector<2x32xf32>
    %40 = arith.addf %37, %39 : vector<2x32xf32>
    %cst = arith.constant 0.000000e+00 : f32
    %41 = vector.broadcast %cst : f32 to vector<2x32xf32>
    %42 = arith.cmpf ogt, %40, %41 : vector<2x32xf32>
    %cst_11 = arith.constant 0.00999999977 : f32
    %43 = vector.broadcast %cst_11 : f32 to vector<2x32xf32>
    %44 = arith.mulf %43, %40 : vector<2x32xf32>
    %45 = arith.select %42, %40, %44 : vector<2x32xi1>, vector<2x32xf32>
    %46 = arith.truncf %45 : vector<2x32xf32> to vector<2x32xbf16>
    %c0_12 = arith.constant 0 : index
    %c0_13 = arith.constant 0 : index
    %c0_14 = arith.constant 0 : index
    %47 = vector.load %arg6[%c0_12, %c0_13, %c0_14] : memref<1x2x32xbf16, #tpu.memory_space<vmem>>, vector<1x2x32xbf16>
    %48 = vector.shape_cast %47 : vector<1x2x32xbf16> to vector<2x32xbf16>
    %49 = vector.shape_cast %46 : vector<2x32xbf16> to vector<1x2x32xbf16>
    tpu.vector_store %arg6[%c0_12, %c0_13, %c0_14], %49 {strides = array<i32>} : memref<1x2x32xbf16, #tpu.memory_space<vmem>>, vector<1x2x32xbf16>,
    return
  }
  func.func @transform_0(%arg0: i32, %arg1: i32, %arg2: i32) -> (i32, i32, i32) {
    %c0_i32 = arith.constant 0 : i32
    %c0_i32_0 = arith.constant 0 : i32
    %c0_i32_1 = arith.constant 0 : i32
    return %arg1, %c0_i32, %c0_i32_0 : i32, i32, i32
  }
  func.func @transform_1(%arg0: i32, %arg1: i32, %arg2: i32) -> (i32, i32) {
    %c0_i32 = arith.constant 0 : i32
    %c0_i32_0 = arith.constant 0 : i32
    return %c0_i32, %arg0 : i32, i32
  }
  func.func @transform_2(%arg0: i32, %arg1: i32, %arg2: i32) -> (i32, i32) {
    %c0_i32 = arith.constant 0 : i32
    %c0_i32_0 = arith.constant 0 : i32
    return %c0_i32, %arg0 : i32, i32
  }
  func.func @transform_3(%arg0: i32, %arg1: i32, %arg2: i32) -> (i32, i32, i32) {
    %c0_i32 = arith.constant 0 : i32
    return %arg1, %arg2, %arg0 : i32, i32, i32
  }
}

</mosaic_0001>

<llo_original>
// kernel: tpu_custom_call.1
$region0: #{tpu_custom_call.1}
  #allocation0 [shape = 'u32[]', space=smem, size = 0x4, offset = 0x4, fixed_abs, tag = 'smem constant byte address 0x4 - core index']
  #allocation1 [shape = 'u32[144,128]{1,0:T(1,128)}', space=vmem, size = 0x12000, scoped, tag = 'internal scratch']
  %s0 = inlined_call_operand.vmem [shape: f32[6,4,3], index: 0, kind: input, shape index: {}]
  %s1 = inlined_call_operand.vmem [shape: f32[5,32], index: 1, kind: input, shape index: {}]
  %s2 = inlined_call_operand.vmem [shape: f32[1,32], index: 2, kind: input, shape index: {}]
  %s3 = inlined_call_operand.hbm [shape: bf16[6,2,32], index: 3, kind: output, shape index: {}]
  %s4 = sld [smem:[#allocation0]]
  $region45: #{tpu_custom_call.1} parent=0
    _
  %s6 = ssub.s32 1, %s4
  %s7 = scalar_select 0, %s6, %s4
  $region1: #{tpu_custom_call.1} parent=0
    #allocation2 [shape = 'u8[1024]{0}', space=vmem, size = 0x400, scoped, tag = 'output window, operand 0']
    #allocation3 [shape = 's32[2]{0}', space=sflag, size = 0x8, scoped, tag = 'scoped memory for tpu_custom_call.1']
    %8 = vsyncpa [#allocation3], 0
    %s9 = scalar_lea.sflag [#allocation3], 1
    %10 = vsyncpa %s9, 0
    loop: start=0, step=1, limit=8
    $region2: #{tpu_custom_call.1} parent=1 // loop_pre_header
      _
    $region3: #{tpu_custom_call.1} parent=1 // loop_header
      %s12 = sphi 0, %s16
      %p13 = scmp.ge.s32.totalorder %s12, 8
      %s19 = sphi 0, %s38
      %s20 = sphi 0, %s34
      %s21 = sphi 0, %s30
      %s22 = sphi 0, %s19
      %s23 = sphi 0, %s20
      %s24 = sphi 0, %s21
      %s25 = sphi 0, %s22
      %s26 = sphi 0, %s23
      %s27 = sphi 0, %s24
      %s41 = sphi 0, %s43
      %s44 = sphi 0, %s41
      %s45 = sphi 0, %s44
      %s61 = sphi 0, %s45
      %s67 = sphi 0, %s69
      %s70 = sphi 0, %s67
      %s71 = sphi 0, %s70
      %s87 = sphi 0, %s71
      %s93 = sphi 0, %s95
      %s96 = sphi 0, %s93
      %s97 = sphi 0, %s96
      %s113 = sphi 0, %s97
      %s123 = sphi 0, %s125
      %s126 = sphi 0, %s123
      %s127 = sphi 0, %s126
      %s143 = sphi 0, %s127
    $region4: #{tpu_custom_call.1} parent=1 // loop_header_branch
      %15 = sbr.rel (%p13) target = $region8
    $region5: #{tpu_custom_call.1} parent=1 // loop_body
      %s17 = ssub.s32 %s12, 1
      %s18 = ssub.s32 %s12, 2
      %s28 = sadd.s32 1, %s21
      %p29 = scmp.ge.s32.totalorder %s28, 1
      %s30 = scalar_select %p29, 0, %s28
      %s31 = sadd.s32 1, %s20
      %s32 = scalar_select %p29, %s31, %s20
      %p33 = scmp.ge.s32.totalorder %s32, 6
      %s34 = scalar_select %p33, 0, %s32
      %s35 = sadd.s32 1, %s19
      %s36 = scalar_select %p33, %s35, %s19
      %p37 = scmp.ge.s32.totalorder %s36, 1
      %s38 = scalar_select %p37, 0, %s36
      %s39 = ssub.s32 %s20, %s34
      %p40 = scmp.eq.s32.totalorder %s39, 0
      %s42 = sadd.s32 %s41, 1
      %s43 = scalar_select %p40, %s41, %s42
      %p46 = pneg %p40
      %p47 = scmp.eq.s32.totalorder %s12, 5
      %p48 = por %p46, %p47
      %p49 = scmp.ne.s32.totalorder %s41, %s44
      %p50 = scmp.eq.s32.totalorder %s12, 0
      %p51 = por %p49, %p50
      %p52 = scmp.ne.s32.totalorder %s41, %s44
      %p53 = scmp.eq.s32.totalorder %s17, 5
      %p54 = por %p52, %p53
      %p55 = scmp.ne.s32.totalorder %s44, %s45
      %p56 = scmp.eq.s32.totalorder %s17, 0
      %p57 = por %p55, %p56
      %p58 = scmp.ne.s32.totalorder %s44, %s45
      %p59 = scmp.eq.s32.totalorder %s18, 5
      %p60 = por %p58, %p59
      %p62 = scmp.ne.s32.totalorder %s45, %s61
      %p63 = scmp.eq.s32.totalorder %s18, 0
      %p64 = por %p62, %p63
      %s65 = ssub.s32 %s19, %s38
      %p66 = scmp.eq.s32.totalorder %s65, 0
      %s68 = sadd.s32 %s67, 1
      %s69 = scalar_select %p66, %s67, %s68
      %p72 = pneg %p66
      %p73 = scmp.eq.s32.totalorder %s12, 5
      %p74 = por %p72, %p73
      %p75 = scmp.ne.s32.totalorder %s67, %s70
      %p76 = scmp.eq.s32.totalorder %s12, 0
      %p77 = por %p75, %p76
      %p78 = scmp.ne.s32.totalorder %s67, %s70
      %p79 = scmp.eq.s32.totalorder %s17, 5
      %p80 = por %p78, %p79
      %p81 = scmp.ne.s32.totalorder %s70, %s71
      %p82 = scmp.eq.s32.totalorder %s17, 0
      %p83 = por %p81, %p82
      %p84 = scmp.ne.s32.totalorder %s70, %s71
      %p85 = scmp.eq.s32.totalorder %s18, 5
      %p86 = por %p84, %p85
      %p88 = scmp.ne.s32.totalorder %s71, %s87
      %p89 = scmp.eq.s32.totalorder %s18, 0
      %p90 = por %p88, %p89
      %s91 = ssub.s32 %s19, %s38
      %p92 = scmp.eq.s32.totalorder %s91, 0
      %s94 = sadd.s32 %s93, 1
      %s95 = scalar_select %p92, %s93, %s94
      %p98 = pneg %p92
      %p99 = scmp.eq.s32.totalorder %s12, 5
      %p100 = por %p98, %p99
      %p101 = scmp.ne.s32.totalorder %s93, %s96
      %p102 = scmp.eq.s32.totalorder %s12, 0
      %p103 = por %p101, %p102
      %p104 = scmp.ne.s32.totalorder %s93, %s96
      %p105 = scmp.eq.s32.totalorder %s17, 5
      %p106 = por %p104, %p105
      %p107 = scmp.ne.s32.totalorder %s96, %s97
      %p108 = scmp.eq.s32.totalorder %s17, 0
      %p109 = por %p107, %p108
      %p110 = scmp.ne.s32.totalorder %s96, %s97
      %p111 = scmp.eq.s32.totalorder %s18, 5
      %p112 = por %p110, %p111
      %p114 = scmp.ne.s32.totalorder %s97, %s113
      %p115 = scmp.eq.s32.totalorder %s18, 0
      %p116 = por %p114, %p115
      %s117 = ssub.s32 %s20, %s34
      %s118 = ssub.s32 %s21, %s30
      %s119 = sor.u32 %s117, %s118
      %s120 = ssub.s32 %s19, %s38
      %s121 = sor.u32 %s119, %s120
      %p122 = scmp.eq.s32.totalorder %s121, 0
      %s124 = sadd.s32 %s123, 1
      %s125 = scalar_select %p122, %s123, %s124
      %p128 = pneg %p122
      %p129 = scmp.eq.s32.totalorder %s12, 5
      %p130 = por %p128, %p129
      %p131 = scmp.ne.s32.totalorder %s123, %s126
      %p132 = scmp.eq.s32.totalorder %s12, 0
      %p133 = por %p131, %p132
      %p134 = scmp.ne.s32.totalorder %s123, %s126
      %p135 = scmp.eq.s32.totalorder %s17, 5
      %p136 = por %p134, %p135
      %p137 = scmp.ne.s32.totalorder %s126, %s127
      %p138 = scmp.eq.s32.totalorder %s17, 0
      %p139 = por %p137, %p138
      %p140 = scmp.ne.s32.totalorder %s126, %s127
      %p141 = scmp.eq.s32.totalorder %s18, 5
      %p142 = por %p140, %p141
      %p144 = scmp.ne.s32.totalorder %s127, %s143
      %p145 = scmp.eq.s32.totalorder %s18, 0
      %p146 = por %p144, %p145
      %p147 = scmp.le.s32.totalorder 1, %s12
      %p148 = scmp.lt.s32.totalorder %s12, 7
      %p149 = pnand %p147, %p148
      %p150 = pneg %p149
      // Predicated region
      $region9: #{tpu_custom_call.1} parent=5 // pred_check
        _
      $region10: #{tpu_custom_call.1} parent=5 // pred_check_branch
        %152 = sbr.rel (%p149) target = $region12
      $region11: #{tpu_custom_call.1} parent=5 // pred_region
        %s153 = ssub.s32 %s12, 1
        // Predicated region
        $region13: #{tpu_custom_call.1} parent=11 // pred_check
          %p154 = pneg %p83
        $region14: #{tpu_custom_call.1} parent=11 // pred_check_branch
          %156 = sbr.rel (%p154) target = $region16
        $region15: #{tpu_custom_call.1} parent=11 // pred_region
          %p157 = scmp.lt.s32.totalorder %s22, 0
          %s158 = scalar_select %p157, %s22, 0
          %s159 = smul.addr %s158, 8
          %s160 = scalar_lea.vmem %s1, %s159
        $region16: #{tpu_custom_call.1} parent=11 // pred_fallthru
          _
        // Predicated region
        $region17: #{tpu_custom_call.1} parent=11 // pred_check
          %p161 = pneg %p109
        $region18: #{tpu_custom_call.1} parent=11 // pred_check_branch
          %163 = sbr.rel (%p161) target = $region20
        $region19: #{tpu_custom_call.1} parent=11 // pred_region
          %p164 = scmp.lt.s32.totalorder %s22, 0
          %s165 = scalar_select %p164, %s22, 0
          %s166 = scalar_lea.vmem %s2, %s165
        $region20: #{tpu_custom_call.1} parent=11 // pred_fallthru
          _
      $region12: #{tpu_custom_call.1} parent=5 // pred_fallthru
        _
      %p167 = scmp.lt.s32.totalorder %s12, 6
      // Predicated region
      $region21: #{tpu_custom_call.1} parent=5 // pred_check
        %p168 = pneg %p167
      $region22: #{tpu_custom_call.1} parent=5 // pred_check_branch
        %170 = sbr.rel (%p168) target = $region24
      $region23: #{tpu_custom_call.1} parent=5 // pred_region
        // Predicated region
        $region25: #{tpu_custom_call.1} parent=23 // pred_check
          %p171 = pneg %p51
        $region26: #{tpu_custom_call.1} parent=23 // pred_check_branch
          %173 = sbr.rel (%p171) target = $region28
        $region27: #{tpu_custom_call.1} parent=23 // pred_region
          %p174 = scmp.lt.s32.totalorder %s20, 5
          %s175 = scalar_select %p174, %s20, 5
          %s176 = smul.addr %s175, 4
          %s177 = scalar_lea.vmem %s0, %s176
        $region28: #{tpu_custom_call.1} parent=23 // pred_fallthru
          _
      $region24: #{tpu_custom_call.1} parent=5 // pred_fallthru
        _
      %p178 = scmp.le.s32.totalorder 1, %s12
      %p179 = scmp.lt.s32.totalorder %s12, 7
      %p180 = pnand %p178, %p179
      %p181 = pneg %p180
      // Predicated region
      $region29: #{tpu_custom_call.1} parent=5 // pred_check
        _
      $region30: #{tpu_custom_call.1} parent=5 // pred_check_branch
        %183 = sbr.rel (%p180) target = $region32
      $region31: #{tpu_custom_call.1} parent=5 // pred_region
        %s184 = ssub.s32 %s12, 1
        %p185 = scmp.lt.s32.totalorder %s23, 5
        %s186 = scalar_select %p185, %s23, 5
        %s187 = smul.addr %s186, 4
        %s188 = scalar_lea.vmem %s0, %s187
        %p189 = pneg %p57
        %p190 = pneg %p54
        %p191 = scmp.lt.s32.totalorder %s22, 0
        %s192 = scalar_select %p191, %s22, 0
        %s193 = smul.addr %s192, 8
        %s194 = scalar_lea.vmem %s1, %s193
        %p195 = pneg %p83
        %p196 = pneg %p80
        %p197 = scmp.lt.s32.totalorder %s22, 0
        %s198 = scalar_select %p197, %s22, 0
        %s199 = scalar_lea.vmem %s2, %s198
        %p200 = pneg %p109
        %p201 = pneg %p106
        %p202 = pneg %p139
        %p203 = pneg %p136
        %s204 = sand.u32 %s126, 1
        %s205 = scalar_lea.sflag [#allocation3], %s204
        %s206 = sand.u32 %s126, 1
        %s207 = scalar_lea.vmem [#allocation2], %s206
        %p208 = scmp.lt.s32.totalorder %s23, 5
        %s209 = scalar_select %p208, %s23, 5
        %s210 = smul.addr %s209, 4
        %s211 = scalar_lea.vmem %s0, %s210
        %p212 = scmp.lt.s32.totalorder %s22, 0
        %s213 = scalar_select %p212, %s22, 0
        %s214 = smul.addr %s213, 8
        %s215 = scalar_lea.vmem %s1, %s214
        %p216 = scmp.lt.s32.totalorder %s22, 0
        %s217 = scalar_select %p216, %s22, 0
        %s218 = scalar_lea.vmem %s2, %s217
        %s219 = smul.u32 %s24, 2
        %s220 = scalar_lea.vmem %s211, %s219
        %v221 = vld [vmem:[%s220] sm:$0x3]
        %v222 = vld [vmem:[%s215] sm:$0x1]
        %224 = vset.pattern.permute.xlu0 0
        %225 = vperm.xlu0 %224, %v221
        %v226 = vpop.permute.xlu0 %225
        %v228 = vlaneseq
        %v229 = vshrl.u32 %v228, 7
        %v230 = vsub.s32 0, %v229
        %v231 = vrot.slane %v222, %v230
        %v232 = vmul.f32 %v226, %v231
        %v233 = vld [vmem:[%s215 + $0x1] sm:$0x1]
        %234 = vset.pattern.permute.xlu0 1
        %235 = vperm.xlu0 %234, %v221
        %v236 = vpop.permute.xlu0 %235
        %v238 = vlaneseq
        %v239 = vshrl.u32 %v238, 7
        %v240 = vsub.s32 0, %v239
        %v241 = vrot.slane %v233, %v240
        %v242 = vmul.f32 %v236, %v241
        %v243 = vadd.f32 %v232, %v242
        %v244 = vld [vmem:[%s215 + $0x2] sm:$0x1]
        %245 = vset.pattern.permute.xlu0 2
        %246 = vperm.xlu0 %245, %v221
        %v247 = vpop.permute.xlu0 %246
        %v249 = vlaneseq
        %v250 = vshrl.u32 %v249, 7
        %v251 = vsub.s32 0, %v250
        %v252 = vrot.slane %v244, %v251
        %v253 = vmul.f32 %v247, %v252
        %v254 = vadd.f32 %v243, %v253
        %s255 = sadd.s32 %s219, 1
        %s256 = scalar_lea.vmem %s211, %s255
        %v257 = vld [vmem:[%s256] sm:$0x3]
        %v258 = vld [vmem:[%s215 + $0x3] sm:$0x1]
        %260 = vset.pattern.permute.xlu0 0
        %261 = vperm.xlu0 %260, %v257
        %v262 = vpop.permute.xlu0 %261
        %v264 = vlaneseq
        %v265 = vshrl.u32 %v264, 7
        %v266 = vsub.s32 0, %v265
        %v267 = vrot.slane %v258, %v266
        %v268 = vmul.f32 %v262, %v267
        %v269 = vld [vmem:[%s215 + $0x4] sm:$0x1]
        %270 = vset.pattern.permute.xlu0 1
        %271 = vperm.xlu0 %270, %v257
        %v272 = vpop.permute.xlu0 %271
        %v274 = vlaneseq
        %v275 = vshrl.u32 %v274, 7
        %v276 = vsub.s32 0, %v275
        %v277 = vrot.slane %v269, %v276
        %v278 = vmul.f32 %v272, %v277
        %v279 = vadd.f32 %v268, %v278
        %v280 = vadd.f32 %v254, %v279
        %v281 = vld [vmem:[%s218] sm:$0x1]
        %v283 = vlaneseq
        %v284 = vshrl.u32 %v283, 7
        %v285 = vsub.s32 0, %v284
        %v286 = vrot.slane %v281, %v285
        %v288 = vadd.f32 %v280, %v286
        %vm289 = vcmp.gt.f32.partialorder %v288, 0.0
        %v290 = vmul.f32 %v288, 0.01
        %v291 = vsel %vm289, %v288, %v290
        %v292 = vpack.c.bf16 %v291, %v291
        %vm293 = vcmask 253952
        %294 = vst.msk [vmem:[%s207] sm:$0x1] %vm293, %v292
        %s295 = sand.u32 %s126, 1
        %s296 = scalar_lea.sflag [#allocation3], %s295
        %s297 = sand.u32 %s126, 1
        %s298 = scalar_lea.vmem [#allocation2], %s297
        // Predicated region
        $region33: #{tpu_custom_call.1} parent=31 // pred_check
          %p299 = pneg %p136
        $region34: #{tpu_custom_call.1} parent=31 // pred_check_branch
          %301 = sbr.rel (%p299) target = $region36
        $region35: #{tpu_custom_call.1} parent=31 // pred_region
          %s303 = ssub.s32 16, 16
          %304 = vsyncadd %s296, %s303
          %s305 = sadd.s32 %s22, %s24
          %s306 = sadd.s32 %s305, %s23
          %s307 = smul.addr %s306, 16
          %s308 = scalar_lea.hbm %s3, %s307
          %s310 = sshll.u32 %s298, 4
          %s311 = int_to_ptr.vmem [resolvable:$true] %s310
          %313 = dma.vmem_to_hbm [thread:$0]  %s311, 16, %s308, %s296
        $region36: #{tpu_custom_call.1} parent=31 // pred_fallthru
          _
      $region32: #{tpu_custom_call.1} parent=5 // pred_fallthru
        _
      %p314 = scmp.le.s32.totalorder 2, %s12
      // Predicated region
      $region37: #{tpu_custom_call.1} parent=5 // pred_check
        %p315 = pneg %p314
      $region38: #{tpu_custom_call.1} parent=5 // pred_check_branch
        %317 = sbr.rel (%p315) target = $region40
      $region39: #{tpu_custom_call.1} parent=5 // pred_region
        %s318 = ssub.s32 %s12, 2
        // Predicated region
        $region41: #{tpu_custom_call.1} parent=39 // pred_check
          %p319 = pneg %p142
        $region42: #{tpu_custom_call.1} parent=39 // pred_check_branch
          %321 = sbr.rel (%p319) target = $region44
        $region43: #{tpu_custom_call.1} parent=39 // pred_region
          %s322 = sand.u32 %s127, 1
          %s323 = scalar_lea.sflag [#allocation3], %s322
          %s324 = sand.u32 %s127, 1
          %s325 = scalar_lea.vmem [#allocation2], %s324
          %326 = dma.done %s323, 16
        $region44: #{tpu_custom_call.1} parent=39 // pred_fallthru
          _
      $region40: #{tpu_custom_call.1} parent=5 // pred_fallthru
        _
    $region6: #{tpu_custom_call.1} parent=1 // loop_footer
      %s16 = sadd.s32 1, %s12
    $region7: #{tpu_custom_call.1} parent=1 // loop_footer_branch
      %11 = sbr.rel target = $region3
    $region8: #{tpu_custom_call.1} parent=1 // loop_exit
      _
    %327 = vsyncpa [#allocation3], 1
    %s328 = scalar_lea.sflag [#allocation3], 1
    %329 = vsyncpa %s328, 1

</llo_original>
